<compile_context>
chip_gen: v6e
topology: v6e:2x2x1
jax: 0.10.0
libtpu: 0.0.40
codegen_flags: <defaults>
</compile_context>

<pallas_src>
import functools

import jax
import jax.numpy as jnp
from jax.experimental import pallas as pl
from jax.experimental.pallas import tpu as pltpu

_NUM_PARALLEL = 2                              # v7x: 2 TensorCores; no-op elsewhere
_INPUT_STREAM_VMEM_BYTES = 6 * 1024 * 1024     # double-buffered logits+labels blocks
_VMEM_LIMIT_BYTES = 32 * 1024 * 1024           # safe on v5e/v6e (128 MiB) and v7x (64 MiB)
_MAX_LANES = 4096


def _pow(v, p):
    if p == 2:
        return v * v
    if p == 1:
        return v
    return v ** p


def _choose_slab(total, natural_rows, natural_lanes):
    """Pick a (rows, lanes) factorization of `total` with lanes % 128 == 0."""
    if natural_lanes % 128 == 0 and natural_rows >= 8:
        return natural_rows, natural_lanes      # already lane-dense
    max_lanes = min(_MAX_LANES, total // 8)
    lanes = (max_lanes // 128) * 128
    while lanes >= 128:
        if total % lanes == 0:
            return total // lanes, lanes
        lanes -= 128
    # TODO(synk): no lane-dense factorization exists (e.g. odd element count);
    # the natural shape wastes lanes when W*C is far below 128.
    return natural_rows, natural_lanes


def _dice_kernel(lg_ref, lb_ref, part_ref, *, tm, rows, lanes, inner, p,
                 approx_sigmoid, needs_mask):
    pc = pl.program_id(0)        # parallel (per-TensorCore) axis
    i = pl.program_id(1)         # sequential reduction axis

    @pl.when(i == 0)
    def _init():
        part_ref[...] = jnp.zeros_like(part_ref)

    x = lg_ref[...].astype(jnp.float32)
    y = lb_ref[...].astype(jnp.float32)

    def accumulate(valid):
        xv, yv = x, y
        if valid is not None:
            xv = jnp.where(valid, xv, 0.0)      # sanitize unspecified OOB rows
        if approx_sigmoid:
            # EUP approx reciprocal: issues in an otherwise-idle slot; clamp
            # keeps exp finite for very negative logits.
            probs = pl.reciprocal(1.0 + jnp.exp(-jnp.maximum(xv, -60.0)),
                                  approx=True)
        else:
            probs = jax.nn.sigmoid(xv)
        if valid is not None:
            probs = jnp.where(valid, probs, 0.0)
            yv = jnp.where(valid, yv, 0.0)
        numer_t = probs * yv
        denor_t = _pow(probs, p) + _pow(yv, p)
        if tm % 8 == 0:
            # Reduce the tile to one (8, lanes) row of partials: sublane-aligned
            # VPU adds only (no XLU); cross-lane reduction happens in the wrapper.
            k = tm // 8
            numer_p = numer_t.reshape(k, 8, lanes).sum(axis=0)
            denor_p = denor_t.reshape(k, 8, lanes).sum(axis=0)
            part_ref[0, 0] = part_ref[0, 0] + numer_p
            part_ref[0, 1] = part_ref[0, 1] + denor_p
        else:
            # Tiny single-tile fallback (tm == rows, rows not a multiple of 8).
            numer_p = numer_t.sum(axis=0, keepdims=True)
            denor_p = denor_t.sum(axis=0, keepdims=True)
            part_ref[0, 0, 0:1, :] = part_ref[0, 0, 0:1, :] + numer_p
            part_ref[0, 1, 0:1, :] = part_ref[0, 1, 0:1, :] + denor_p

    if needs_mask:
        blk = pc * inner + i                    # logical (un-clamped) tile index
        is_full = (blk + 1) * tm <= rows

        @pl.when(is_full)
        def _fast():                            # hot path: no masking
            accumulate(None)

        @pl.when(jnp.logical_not(is_full))
        def _ragged():                          # last tile / duplicate tail tiles
            row_ids = blk * tm + jax.lax.broadcasted_iota(jnp.int32, (tm, 1), 0)
            accumulate(row_ids < rows)
    else:
        accumulate(None)


def soft_dice_loss_v1(logits, labels, *, p=2, smooth=0.0,
                      approx_sigmoid=True, channels_last_logits=False):
    """logits: (N, C, H, W) (or NHWC if channels_last_logits); labels: (N, H, W, C)."""
    if not channels_last_logits:
        n, c, h, w = logits.shape
        if c == 1:
            # Permuting a size-1 axis is a pure (free) reshape -- the common
            # binary-segmentation case pays no extra HBM traffic.
            logits = logits.reshape(n, h, w, c)
        else:
            # TODO(synk): for C > 1 this standalone transpose costs one extra HBM
            # round trip over logits; fusing it in-kernel would make the compute
            # lane-sparse for small C, so the XLA transpose is kept (or pass
            # channels_last_logits=True to skip it).
            logits = jnp.transpose(logits, (0, 2, 3, 1))
    assert logits.shape == labels.shape, (logits.shape, labels.shape)

    n, h, w, c = logits.shape
    total = n * h * w * c
    rows, lanes = _choose_slab(total, n * h, w * c)
    lg2 = logits.reshape(rows, lanes)           # free row-major reshapes
    lb2 = labels.reshape(rows, lanes)

    # Row tile: biggest multiple of 8 that keeps the double-buffered input stream
    # under budget (accumulators are now only (8, lanes) and excluded here).
    bytes_per_row = lanes * 2 * (lg2.dtype.itemsize + lb2.dtype.itemsize)
    tm = _INPUT_STREAM_VMEM_BYTES // bytes_per_row
    if tm >= rows:
        tm = rows                               # single tile; full dim is legal
    else:
        tm = max(8, (tm // 8) * 8)
    # TODO(synk): if lanes were ever so large that tm=8 overshoots the budget, a
    # second grid axis over lane blocks would be needed; not hit at realistic
    # segmentation shapes.

    num_tiles = pl.cdiv(rows, tm)
    inner = pl.cdiv(num_tiles, _NUM_PARALLEL)
    needs_mask = (rows % tm != 0) or (_NUM_PARALLEL * inner != num_tiles)

    kernel = functools.partial(
        _dice_kernel, tm=tm, rows=rows, lanes=lanes, inner=inner,
        p=p, approx_sigmoid=approx_sigmoid, needs_mask=needs_mask)

    def in_map(pc, i):
        # Clamp so duplicate tail blocks (from the parallel-split remainder)
        # re-read the last valid tile; their contribution is masked to zero.
        return (jnp.minimum(pc * inner + i, num_tiles - 1), 0)

    parts = pl.pallas_call(
        kernel,
        out_shape=jax.ShapeDtypeStruct((_NUM_PARALLEL, 2, 8, lanes), jnp.float32),
        grid_spec=pltpu.PrefetchScalarGridSpec(
            num_scalar_prefetch=0,
            grid=(_NUM_PARALLEL, inner),
            in_specs=[
                pl.BlockSpec((tm, lanes), in_map),
                pl.BlockSpec((tm, lanes), in_map),
            ],
            # Output block doubles as the per-core accumulator (resident across i).
            out_specs=pl.BlockSpec((1, 2, 8, lanes), lambda pc, i: (pc, 0, 0, 0)),
        ),
        compiler_params=pltpu.CompilerParams(
            dimension_semantics=("parallel", "arbitrary"),
            vmem_limit_bytes=_VMEM_LIMIT_BYTES,
        ),
    )(lg2, lb2)

    numer = jnp.sum(parts[:, 0])
    denor = jnp.sum(parts[:, 1])
    # NOTE: smooth=0 (module default) leaves denor unguarded for all-zero inputs,
    # mirroring the PyTorch reference.
    return 1.0 - (2.0 * numer + smooth) / (denor + smooth)


def _reference(logits_nchw, labels_nhwc, p=2, smooth=0.0):
    logits = jnp.transpose(logits_nchw, (0, 2, 3, 1)).astype(jnp.float32)
    probs = jax.nn.sigmoid(logits)
    labels = labels_nhwc.astype(jnp.float32)
    numer = jnp.sum(probs * labels)
    denor = jnp.sum(probs ** p + labels ** p)
    return 1.0 - (2.0 * numer + smooth) / (denor + smooth)


if __name__ == "__main__":
    key = jax.random.PRNGKey(0)
    k1, k2, k3, k4 = jax.random.split(key, 4)

    # Multi-channel case (exercises the transpose + lane-dense re-factorization
    # + both the fast and masked accumulate paths via the parallel split).
    N, C, H, W = 2, 4, 16, 16
    logits = jax.random.normal(k1, (N, C, H, W), dtype=jnp.float32)
    labels = (jax.random.uniform(k2, (N, H, W, C)) > 0.5).astype(jnp.float32)

    ref = jax.block_until_ready(_reference(logits, labels))
    exact = jax.block_until_ready(
        soft_dice_loss_v1(logits, labels, approx_sigmoid=False))
    assert jnp.allclose(exact, ref, rtol=1e-5, atol=1e-5), (exact, ref)

    approx = jax.block_until_ready(
        soft_dice_loss_v1(logits, labels, approx_sigmoid=True))
    # approx reciprocal sigmoid: ~1e-4 relative error on the scalar loss.
    assert jnp.allclose(approx, ref, rtol=2e-3, atol=2e-3), (approx, ref)

    # Binary-segmentation case (C == 1: the permute is a free reshape).
    N1, C1, H1, W1 = 2, 1, 16, 16
    logits1 = jax.random.normal(k3, (N1, C1, H1, W1), dtype=jnp.float32)
    labels1 = (jax.random.uniform(k4, (N1, H1, W1, C1)) > 0.5).astype(jnp.float32)
    ref1 = jax.block_until_ready(_reference(logits1, labels1))
    out1 = jax.block_until_ready(
        soft_dice_loss_v1(logits1, labels1, approx_sigmoid=False))
    assert jnp.allclose(out1, ref1, rtol=1e-5, atol=1e-5), (out1, ref1)

    print("KERNEL_OK")
</pallas_src>

<mosaic_0001>
module attributes {stable_mosaic.version = 11 : i64} {
  func.func @_dice_kernel(%arg0: i32, %arg1: i32, %arg2: memref<8x256xf32, #tpu.memory_space<vmem>>, %arg3: memref<8x256xf32, #tpu.memory_space<vmem>>, %arg4: memref<1x2x8x256xf32, #tpu.memory_space<vmem>>) attributes {dimension_semantics = [#tpu.dimension_semantics<parallel>, #tpu.dimension_semantics<arbitrary>], iteration_bounds = array<i64: 2, 1>, scalar_prefetch = 0 : i64, scratch_operands = 0 : i64, tpu.core_type = #tpu.core_type<tc>, window_params = [{transform_indices = @transform_0, window_bounds = array<i64: 8, 256>}, {transform_indices = @transform_1, window_bounds = array<i64: 8, 256>}, {transform_indices = @transform_2, window_bounds = array<i64: 1, 2, 8, 256>}]} {
    %c0_i32 = arith.constant 0 : i32
    %0 = arith.cmpi eq, %arg1, %c0_i32 : i32
    %1 = arith.extui %0 : i1 to i32
    %c0_i32_0 = arith.constant 0 : i32
    %2 = arith.cmpi ne, %1, %c0_i32_0 : i32
    scf.if %2 {
      %cst = arith.constant 0.000000e+00 : f32
      %15 = vector.broadcast %cst : f32 to vector<1x2x8x256xf32>
      %c0_8 = arith.constant 0 : index
      %c0_9 = arith.constant 0 : index
      %c0_10 = arith.constant 0 : index
      %c0_11 = arith.constant 0 : index
      %16 = vector.load %arg4[%c0_8, %c0_9, %c0_10, %c0_11] : memref<1x2x8x256xf32, #tpu.memory_space<vmem>>, vector<1x2x8x256xf32>
      tpu.vector_store %arg4[%c0_8, %c0_9, %c0_10, %c0_11], %15 {strides = array<i32>} : memref<1x2x8x256xf32, #tpu.memory_space<vmem>>, vector<1x2x8x256xf32>,
    } else {
    }
    %c0 = arith.constant 0 : index
    %c0_1 = arith.constant 0 : index
    %3 = vector.load %arg2[%c0, %c0_1] : memref<8x256xf32, #tpu.memory_space<vmem>>, vector<8x256xf32>
    %c0_2 = arith.constant 0 : index
    %c0_3 = arith.constant 0 : index
    %4 = vector.load %arg3[%c0_2, %c0_3] : memref<8x256xf32, #tpu.memory_space<vmem>>, vector<8x256xf32>
    %c1_i32 = arith.constant 1 : i32
    %5 = arith.muli %arg0, %c1_i32 : i32
    %6 = arith.addi %5, %arg1 : i32
    %c1_i32_4 = arith.constant 1 : i32
    %7 = arith.addi %6, %c1_i32_4 : i32
    %c8_i32 = arith.constant 8 : i32
    %8 = arith.muli %7, %c8_i32 : i32
    %c8_i32_5 = arith.constant 8 : i32
    %9 = arith.cmpi sle, %8, %c8_i32_5 : i32
    %10 = arith.extui %9 : i1 to i32
    %c0_i32_6 = arith.constant 0 : i32
    %11 = arith.cmpi ne, %10, %c0_i32_6 : i32
    scf.if %11 {
      %15 = arith.negf %3 : vector<8x256xf32>
      %16 = math.exp %15 : vector<8x256xf32>
      %cst = arith.constant 1.000000e+00 : f32
      %17 = vector.broadcast %cst : f32 to vector<8x256xf32>
      %18 = arith.addf %17, %16 : vector<8x256xf32>
      %19 = arith.divf %17, %18 : vector<8x256xf32>
      %20 = arith.mulf %19, %4 : vector<8x256xf32>
      %21 = arith.mulf %19, %19 : vector<8x256xf32>
      %22 = arith.mulf %4, %4 : vector<8x256xf32>
      %23 = arith.addf %21, %22 : vector<8x256xf32>
      %24 = vector.shape_cast %20 : vector<8x256xf32> to vector<1x8x256xf32>
      %cst_8 = arith.constant dense<0.000000e+00> : vector<8x256xf32>
      %25 = vector.multi_reduction <add>, %24, %cst_8 [0] : vector<1x8x256xf32> to vector<8x256xf32>
      %26 = vector.shape_cast %23 : vector<8x256xf32> to vector<1x8x256xf32>
      %cst_9 = arith.constant dense<0.000000e+00> : vector<8x256xf32>
      %27 = vector.multi_reduction <add>, %26, %cst_9 [0] : vector<1x8x256xf32> to vector<8x256xf32>
      %c0_10 = arith.constant 0 : index
      %c0_11 = arith.constant 0 : index
      %c0_12 = arith.constant 0 : index
      %c0_13 = arith.constant 0 : index
      %28 = vector.load %arg4[%c0_10, %c0_11, %c0_12, %c0_13] : memref<1x2x8x256xf32, #tpu.memory_space<vmem>>, vector<1x1x8x256xf32>
      %29 = vector.shape_cast %28 : vector<1x1x8x256xf32> to vector<8x256xf32>
      %30 = arith.addf %29, %25 : vector<8x256xf32>
      %c0_14 = arith.constant 0 : index
      %c0_15 = arith.constant 0 : index
      %c0_16 = arith.constant 0 : index
      %c0_17 = arith.constant 0 : index
      %31 = vector.load %arg4[%c0_14, %c0_15, %c0_16, %c0_17] : memref<1x2x8x256xf32, #tpu.memory_space<vmem>>, vector<1x1x8x256xf32>
      %32 = vector.shape_cast %31 : vector<1x1x8x256xf32> to vector<8x256xf32>
      %33 = vector.shape_cast %30 : vector<8x256xf32> to vector<1x1x8x256xf32>
      tpu.vector_store %arg4[%c0_14, %c0_15, %c0_16, %c0_17], %33 {strides = array<i32>} : memref<1x2x8x256xf32, #tpu.memory_space<vmem>>, vector<1x1x8x256xf32>,
      %c0_18 = arith.constant 0 : index
      %c1 = arith.constant 1 : index
      %c0_19 = arith.constant 0 : index
      %c0_20 = arith.constant 0 : index
      %34 = vector.load %arg4[%c0_18, %c1, %c0_19, %c0_20] : memref<1x2x8x256xf32, #tpu.memory_space<vmem>>, vector<1x1x8x256xf32>
      %35 = vector.shape_cast %34 : vector<1x1x8x256xf32> to vector<8x256xf32>
      %36 = arith.addf %35, %27 : vector<8x256xf32>
      %c0_21 = arith.constant 0 : index
      %c1_22 = arith.constant 1 : index
      %c0_23 = arith.constant 0 : index
      %c0_24 = arith.constant 0 : index
      %37 = vector.load %arg4[%c0_21, %c1_22, %c0_23, %c0_24] : memref<1x2x8x256xf32, #tpu.memory_space<vmem>>, vector<1x1x8x256xf32>
      %38 = vector.shape_cast %37 : vector<1x1x8x256xf32> to vector<8x256xf32>
      %39 = vector.shape_cast %36 : vector<8x256xf32> to vector<1x1x8x256xf32>
      tpu.vector_store %arg4[%c0_21, %c1_22, %c0_23, %c0_24], %39 {strides = array<i32>} : memref<1x2x8x256xf32, #tpu.memory_space<vmem>>, vector<1x1x8x256xf32>,
    } else {
    }
    %true = arith.constant true
    %12 = arith.xori %9, %true : i1
    %13 = arith.extui %12 : i1 to i32
    %c0_i32_7 = arith.constant 0 : i32
    %14 = arith.cmpi ne, %13, %c0_i32_7 : i32
    scf.if %14 {
      %c8_i32_8 = arith.constant 8 : i32
      %15 = arith.muli %6, %c8_i32_8 : i32
      %16 = tpu.iota {dimensions = array<i32: 0>} : vector<8x1xi32>
      %17 = vector.broadcast %15 : i32 to vector<8x1xi32>
      %18 = arith.addi %17, %16 : vector<8x1xi32>
      %c8_i32_9 = arith.constant 8 : i32
      %19 = vector.broadcast %c8_i32_9 : i32 to vector<8x1xi32>
      %20 = arith.cmpi slt, %18, %19 : vector<8x1xi32>
      %cst = arith.constant 0.000000e+00 : f32
      %21 = vector.shape_cast %20 : vector<8x1xi1> to vector<8x1xi1>
      %22 = vector.broadcast %21 : vector<8x1xi1> to vector<8x256xi1>
      %23 = vector.broadcast %cst : f32 to vector<8x256xf32>
      %24 = arith.select %22, %3, %23 : vector<8x256xi1>, vector<8x256xf32>
      %25 = arith.negf %24 : vector<8x256xf32>
      %26 = math.exp %25 : vector<8x256xf32>
      %cst_10 = arith.constant 1.000000e+00 : f32
      %27 = vector.broadcast %cst_10 : f32 to vector<8x256xf32>
      %28 = arith.addf %27, %26 : vector<8x256xf32>
      %29 = arith.divf %27, %28 : vector<8x256xf32>
      %cst_11 = arith.constant 0.000000e+00 : f32
      %30 = vector.shape_cast %20 : vector<8x1xi1> to vector<8x1xi1>
      %31 = vector.broadcast %30 : vector<8x1xi1> to vector<8x256xi1>
      %32 = vector.broadcast %cst_11 : f32 to vector<8x256xf32>
      %33 = arith.select %31, %29, %32 : vector<8x256xi1>, vector<8x256xf32>
      %cst_12 = arith.constant 0.000000e+00 : f32
      %34 = vector.shape_cast %20 : vector<8x1xi1> to vector<8x1xi1>
      %35 = vector.broadcast %34 : vector<8x1xi1> to vector<8x256xi1>
      %36 = vector.broadcast %cst_12 : f32 to vector<8x256xf32>
      %37 = arith.select %35, %4, %36 : vector<8x256xi1>, vector<8x256xf32>
      %38 = arith.mulf %33, %37 : vector<8x256xf32>
      %39 = arith.mulf %33, %33 : vector<8x256xf32>
      %40 = arith.mulf %37, %37 : vector<8x256xf32>
      %41 = arith.addf %39, %40 : vector<8x256xf32>
      %42 = vector.shape_cast %38 : vector<8x256xf32> to vector<1x8x256xf32>
      %cst_13 = arith.constant dense<0.000000e+00> : vector<8x256xf32>
      %43 = vector.multi_reduction <add>, %42, %cst_13 [0] : vector<1x8x256xf32> to vector<8x256xf32>
      %44 = vector.shape_cast %41 : vector<8x256xf32> to vector<1x8x256xf32>
      %cst_14 = arith.constant dense<0.000000e+00> : vector<8x256xf32>
      %45 = vector.multi_reduction <add>, %44, %cst_14 [0] : vector<1x8x256xf32> to vector<8x256xf32>
      %c0_15 = arith.constant 0 : index
      %c0_16 = arith.constant 0 : index
      %c0_17 = arith.constant 0 : index
      %c0_18 = arith.constant 0 : index
      %46 = vector.load %arg4[%c0_15, %c0_16, %c0_17, %c0_18] : memref<1x2x8x256xf32, #tpu.memory_space<vmem>>, vector<1x1x8x256xf32>
      %47 = vector.shape_cast %46 : vector<1x1x8x256xf32> to vector<8x256xf32>
      %48 = arith.addf %47, %43 : vector<8x256xf32>
      %c0_19 = arith.constant 0 : index
      %c0_20 = arith.constant 0 : index
      %c0_21 = arith.constant 0 : index
      %c0_22 = arith.constant 0 : index
      %49 = vector.load %arg4[%c0_19, %c0_20, %c0_21, %c0_22] : memref<1x2x8x256xf32, #tpu.memory_space<vmem>>, vector<1x1x8x256xf32>
      %50 = vector.shape_cast %49 : vector<1x1x8x256xf32> to vector<8x256xf32>
      %51 = vector.shape_cast %48 : vector<8x256xf32> to vector<1x1x8x256xf32>
      tpu.vector_store %arg4[%c0_19, %c0_20, %c0_21, %c0_22], %51 {strides = array<i32>} : memref<1x2x8x256xf32, #tpu.memory_space<vmem>>, vector<1x1x8x256xf32>,
      %c0_23 = arith.constant 0 : index
      %c1 = arith.constant 1 : index
      %c0_24 = arith.constant 0 : index
      %c0_25 = arith.constant 0 : index
      %52 = vector.load %arg4[%c0_23, %c1, %c0_24, %c0_25] : memref<1x2x8x256xf32, #tpu.memory_space<vmem>>, vector<1x1x8x256xf32>
      %53 = vector.shape_cast %52 : vector<1x1x8x256xf32> to vector<8x256xf32>
      %54 = arith.addf %53, %45 : vector<8x256xf32>
      %c0_26 = arith.constant 0 : index
      %c1_27 = arith.constant 1 : index
      %c0_28 = arith.constant 0 : index
      %c0_29 = arith.constant 0 : index
      %55 = vector.load %arg4[%c0_26, %c1_27, %c0_28, %c0_29] : memref<1x2x8x256xf32, #tpu.memory_space<vmem>>, vector<1x1x8x256xf32>
      %56 = vector.shape_cast %55 : vector<1x1x8x256xf32> to vector<8x256xf32>
      %57 = vector.shape_cast %54 : vector<8x256xf32> to vector<1x1x8x256xf32>
      tpu.vector_store %arg4[%c0_26, %c1_27, %c0_28, %c0_29], %57 {strides = array<i32>} : memref<1x2x8x256xf32, #tpu.memory_space<vmem>>, vector<1x1x8x256xf32>,
    } else {
    }
    return
  }
  func.func @transform_0(%arg0: i32, %arg1: i32) -> (i32, i32) {
    %c1_i32 = arith.constant 1 : i32
    %0 = arith.muli %arg0, %c1_i32 : i32
    %1 = arith.addi %0, %arg1 : i32
    %c0_i32 = arith.constant 0 : i32
    %2 = arith.minsi %1, %c0_i32 : i32
    %c0_i32_0 = arith.constant 0 : i32
    %c0_i32_1 = arith.constant 0 : i32
    return %2, %c0_i32_0 : i32, i32
  }
  func.func @transform_1(%arg0: i32, %arg1: i32) -> (i32, i32) {
    %c1_i32 = arith.constant 1 : i32
    %0 = arith.muli %arg0, %c1_i32 : i32
    %1 = arith.addi %0, %arg1 : i32
    %c0_i32 = arith.constant 0 : i32
    %2 = arith.minsi %1, %c0_i32 : i32
    %c0_i32_0 = arith.constant 0 : i32
    %c0_i32_1 = arith.constant 0 : i32
    return %2, %c0_i32_0 : i32, i32
  }
  func.func @transform_2(%arg0: i32, %arg1: i32) -> (i32, i32, i32, i32) {
    %c0_i32 = arith.constant 0 : i32
    %c0_i32_0 = arith.constant 0 : i32
    %c0_i32_1 = arith.constant 0 : i32
    %c0_i32_2 = arith.constant 0 : i32
    return %arg0, %c0_i32, %c0_i32_0, %c0_i32_1 : i32, i32, i32, i32
  }
}

</mosaic_0001>

<llo_original>
// kernel: tpu_custom_call.1
$region0: #{tpu_custom_call.1}
  #allocation0 [shape = 'u32[]', space=smem, size = 0x4, offset = 0x4, fixed_abs, tag = 'smem constant byte address 0x4 - core index']
  #allocation1 [shape = 'u32[144,128]{1,0:T(1,128)}', space=vmem, size = 0x12000, scoped, tag = 'internal scratch']
  %s0 = inlined_call_operand.hbm [shape: f32[8,256], index: 0, kind: input, shape index: {}]
  %s1 = inlined_call_operand.hbm [shape: f32[8,256], index: 1, kind: input, shape index: {}]
  %s2 = inlined_call_operand.hbm [shape: f32[2,2,8,256], index: 2, kind: output, shape index: {}]
  %s3 = sld [smem:[#allocation0]]
  $region61: #{tpu_custom_call.1} parent=0
    _
  %s5 = ssub.s32 1, %s3
  %s6 = scalar_select 0, %s5, %s3
  $region1: #{tpu_custom_call.1} parent=0
    #allocation2 [shape = 'u8[16384]{0}', space=vmem, size = 0x4000, scoped, tag = 'input window, operand 0']
    #allocation3 [shape = 's32[2]{0}', space=sflag, size = 0x8, scoped, tag = 'scoped memory for tpu_custom_call.1']
    #allocation4 [shape = 's32[2]{0}', space=sflag, size = 0x8, scoped, tag = 'scoped memory for tpu_custom_call.1']
    #allocation5 [shape = 'u8[16384]{0}', space=vmem, size = 0x4000, scoped, tag = 'input window, operand 1']
    #allocation6 [shape = 's32[2]{0}', space=sflag, size = 0x8, scoped, tag = 'scoped memory for tpu_custom_call.1']
    #allocation7 [shape = 'u8[32768]{0}', space=vmem, size = 0x8000, scoped, tag = 'output window, operand 0']
    %7 = vsyncpa [#allocation3], 0
    %s8 = scalar_lea.sflag [#allocation3], 1
    %9 = vsyncpa %s8, 0
    %10 = vsyncpa [#allocation6], 0
    %s11 = scalar_lea.sflag [#allocation6], 1
    %12 = vsyncpa %s11, 0
    %13 = vsyncpa [#allocation4], 0
    %s14 = scalar_lea.sflag [#allocation4], 1
    %15 = vsyncpa %s14, 0
    loop: start=0, step=1, limit=4
    $region2: #{tpu_custom_call.1} parent=1 // loop_pre_header
      _
    $region3: #{tpu_custom_call.1} parent=1 // loop_header
      %s17 = sphi 0, %s21
      %p18 = scmp.ge.s32.totalorder %s17, 4
      %s24 = sphi 0, %s36
      %s25 = sphi 0, %s32
      %s26 = sphi 0, %s24
      %s27 = sphi 0, %s25
      %s28 = sphi 0, %s26
      %s29 = sphi 0, %s27
      %s45 = sphi 0, %s47
      %s48 = sphi 0, %s45
      %s49 = sphi 0, %s48
      %s65 = sphi 0, %s49
      %s77 = sphi 0, %s79
      %s80 = sphi 0, %s77
      %s81 = sphi 0, %s80
      %s97 = sphi 0, %s81
      %s103 = sphi 0, %s105
      %s106 = sphi 0, %s103
      %s107 = sphi 0, %s106
      %s123 = sphi 0, %s107
    $region4: #{tpu_custom_call.1} parent=1 // loop_header_branch
      %20 = sbr.rel (%p18) target = $region8
    $region5: #{tpu_custom_call.1} parent=1 // loop_body
      %s22 = ssub.s32 %s17, 1
      %s23 = ssub.s32 %s17, 2
      %s30 = sadd.s32 1, %s25
      %p31 = scmp.ge.s32.totalorder %s30, 1
      %s32 = scalar_select %p31, 0, %s30
      %s33 = sadd.s32 1, %s24
      %s34 = scalar_select %p31, %s33, %s24
      %p35 = scmp.ge.s32.totalorder %s34, 2
      %s36 = scalar_select %p35, 0, %s34
      %s37 = sadd.s32 %s24, %s25
      %p38 = scmp.lt.s32.totalorder %s37, 0
      %s39 = scalar_select %p38, %s37, 0
      %s40 = sadd.s32 %s36, %s32
      %p41 = scmp.lt.s32.totalorder %s40, 0
      %s42 = scalar_select %p41, %s40, 0
      %s43 = ssub.s32 %s39, %s42
      %p44 = scmp.eq.s32.totalorder %s43, 0
      %s46 = sadd.s32 %s45, 1
      %s47 = scalar_select %p44, %s45, %s46
      %p50 = pneg %p44
      %p51 = scmp.eq.s32.totalorder %s17, 1
      %p52 = por %p50, %p51
      %p53 = scmp.ne.s32.totalorder %s45, %s48
      %p54 = scmp.eq.s32.totalorder %s17, 0
      %p55 = por %p53, %p54
      %p56 = scmp.ne.s32.totalorder %s45, %s48
      %p57 = scmp.eq.s32.totalorder %s22, 1
      %p58 = por %p56, %p57
      %p59 = scmp.ne.s32.totalorder %s48, %s49
      %p60 = scmp.eq.s32.totalorder %s22, 0
      %p61 = por %p59, %p60
      %p62 = scmp.ne.s32.totalorder %s48, %s49
      %p63 = scmp.eq.s32.totalorder %s23, 1
      %p64 = por %p62, %p63
      %p66 = scmp.ne.s32.totalorder %s49, %s65
      %p67 = scmp.eq.s32.totalorder %s23, 0
      %p68 = por %p66, %p67
      %s69 = sadd.s32 %s24, %s25
      %p70 = scmp.lt.s32.totalorder %s69, 0
      %s71 = scalar_select %p70, %s69, 0
      %s72 = sadd.s32 %s36, %s32
      %p73 = scmp.lt.s32.totalorder %s72, 0
      %s74 = scalar_select %p73, %s72, 0
      %s75 = ssub.s32 %s71, %s74
      %p76 = scmp.eq.s32.totalorder %s75, 0
      %s78 = sadd.s32 %s77, 1
      %s79 = scalar_select %p76, %s77, %s78
      %p82 = pneg %p76
      %p83 = scmp.eq.s32.totalorder %s17, 1
      %p84 = por %p82, %p83
      %p85 = scmp.ne.s32.totalorder %s77, %s80
      %p86 = scmp.eq.s32.totalorder %s17, 0
      %p87 = por %p85, %p86
      %p88 = scmp.ne.s32.totalorder %s77, %s80
      %p89 = scmp.eq.s32.totalorder %s22, 1
      %p90 = por %p88, %p89
      %p91 = scmp.ne.s32.totalorder %s80, %s81
      %p92 = scmp.eq.s32.totalorder %s22, 0
      %p93 = por %p91, %p92
      %p94 = scmp.ne.s32.totalorder %s80, %s81
      %p95 = scmp.eq.s32.totalorder %s23, 1
      %p96 = por %p94, %p95
      %p98 = scmp.ne.s32.totalorder %s81, %s97
      %p99 = scmp.eq.s32.totalorder %s23, 0
      %p100 = por %p98, %p99
      %s101 = ssub.s32 %s24, %s36
      %p102 = scmp.eq.s32.totalorder %s101, 0
      %s104 = sadd.s32 %s103, 1
      %s105 = scalar_select %p102, %s103, %s104
      %p108 = pneg %p102
      %p109 = scmp.eq.s32.totalorder %s17, 1
      %p110 = por %p108, %p109
      %p111 = scmp.ne.s32.totalorder %s103, %s106
      %p112 = scmp.eq.s32.totalorder %s17, 0
      %p113 = por %p111, %p112
      %p114 = scmp.ne.s32.totalorder %s103, %s106
      %p115 = scmp.eq.s32.totalorder %s22, 1
      %p116 = por %p114, %p115
      %p117 = scmp.ne.s32.totalorder %s106, %s107
      %p118 = scmp.eq.s32.totalorder %s22, 0
      %p119 = por %p117, %p118
      %p120 = scmp.ne.s32.totalorder %s106, %s107
      %p121 = scmp.eq.s32.totalorder %s23, 1
      %p122 = por %p120, %p121
      %p124 = scmp.ne.s32.totalorder %s107, %s123
      %p125 = scmp.eq.s32.totalorder %s23, 0
      %p126 = por %p124, %p125
      %p127 = scmp.le.s32.totalorder 1, %s17
      %p128 = scmp.lt.s32.totalorder %s17, 3
      %p129 = pnand %p127, %p128
      %p130 = pneg %p129
      // Predicated region
      $region9: #{tpu_custom_call.1} parent=5 // pred_check
        _
      $region10: #{tpu_custom_call.1} parent=5 // pred_check_branch
        %132 = sbr.rel (%p129) target = $region12
      $region11: #{tpu_custom_call.1} parent=5 // pred_region
        %s133 = ssub.s32 %s17, 1
      $region12: #{tpu_custom_call.1} parent=5 // pred_fallthru
        _
      %p134 = scmp.lt.s32.totalorder %s17, 2
      // Predicated region
      $region13: #{tpu_custom_call.1} parent=5 // pred_check
        %p135 = pneg %p134
      $region14: #{tpu_custom_call.1} parent=5 // pred_check_branch
        %137 = sbr.rel (%p135) target = $region16
      $region15: #{tpu_custom_call.1} parent=5 // pred_region
        // Predicated region
        $region17: #{tpu_custom_call.1} parent=15 // pred_check
          %p138 = pneg %p55
        $region18: #{tpu_custom_call.1} parent=15 // pred_check_branch
          %140 = sbr.rel (%p138) target = $region20
        $region19: #{tpu_custom_call.1} parent=15 // pred_region
          %s141 = sand.u32 %s45, 1
          %s142 = scalar_lea.sflag [#allocation3], %s141
          %s143 = sand.u32 %s45, 1
          %s144 = smul.addr %s143, 16
          %s145 = scalar_lea.vmem [#allocation2], %s144
          %s146 = sadd.s32 %s24, %s25
          %p147 = scmp.lt.s32.totalorder %s146, 0
          %s148 = scalar_select %p147, %s146, 0
          %s150 = ssub.s32 256, 256
          %151 = vsyncadd %s142, %s150
          %s152 = smul.addr %s148, 2
          %s153 = smul.addr %s152, 128
          %s154 = scalar_lea.hbm %s0, %s153
          %s156 = sshll.u32 %s145, 4
          %s157 = int_to_ptr.vmem [resolvable:$true] %s156
          %159 = dma.hbm_to_vmem [thread:$0]  %s154, 256, %s157, %s142
        $region20: #{tpu_custom_call.1} parent=15 // pred_fallthru
          _
        // Predicated region
        $region21: #{tpu_custom_call.1} parent=15 // pred_check
          %p160 = pneg %p87
        $region22: #{tpu_custom_call.1} parent=15 // pred_check_branch
          %162 = sbr.rel (%p160) target = $region24
        $region23: #{tpu_custom_call.1} parent=15 // pred_region
          %s163 = sand.u32 %s77, 1
          %s164 = scalar_lea.sflag [#allocation6], %s163
          %s165 = sand.u32 %s77, 1
          %s166 = smul.addr %s165, 16
          %s167 = scalar_lea.vmem [#allocation5], %s166
          %s168 = sadd.s32 %s24, %s25
          %p169 = scmp.lt.s32.totalorder %s168, 0
          %s170 = scalar_select %p169, %s168, 0
          %s172 = ssub.s32 256, 256
          %173 = vsyncadd %s164, %s172
          %s174 = smul.addr %s170, 2
          %s175 = smul.addr %s174, 128
          %s176 = scalar_lea.hbm %s1, %s175
          %s178 = sshll.u32 %s167, 4
          %s179 = int_to_ptr.vmem [resolvable:$true] %s178
          %181 = dma.hbm_to_vmem [thread:$0]  %s176, 256, %s179, %s164
        $region24: #{tpu_custom_call.1} parent=15 // pred_fallthru
          _
      $region16: #{tpu_custom_call.1} parent=5 // pred_fallthru
        _
      %p182 = scmp.le.s32.totalorder 1, %s17
      %p183 = scmp.lt.s32.totalorder %s17, 3
      %p184 = pnand %p182, %p183
      %p185 = pneg %p184
      // Predicated region
      $region25: #{tpu_custom_call.1} parent=5 // pred_check
        _
      $region26: #{tpu_custom_call.1} parent=5 // pred_check_branch
        %187 = sbr.rel (%p184) target = $region28
      $region27: #{tpu_custom_call.1} parent=5 // pred_region
        %s188 = ssub.s32 %s17, 1
        %s189 = sand.u32 %s48, 1
        %s190 = scalar_lea.sflag [#allocation3], %s189
        %s191 = sand.u32 %s48, 1
        %s192 = smul.addr %s191, 16
        %s193 = scalar_lea.vmem [#allocation2], %s192
        // Predicated region
        $region29: #{tpu_custom_call.1} parent=27 // pred_check
          %p194 = pneg %p61
        $region30: #{tpu_custom_call.1} parent=27 // pred_check_branch
          %196 = sbr.rel (%p194) target = $region32
        $region31: #{tpu_custom_call.1} parent=27 // pred_region
          %197 = dma.done %s190, 256
        $region32: #{tpu_custom_call.1} parent=27 // pred_fallthru
          _
        %s198 = sand.u32 %s80, 1
        %s199 = scalar_lea.sflag [#allocation6], %s198
        %s200 = sand.u32 %s80, 1
        %s201 = smul.addr %s200, 16
        %s202 = scalar_lea.vmem [#allocation5], %s201
        // Predicated region
        $region33: #{tpu_custom_call.1} parent=27 // pred_check
          %p203 = pneg %p93
        $region34: #{tpu_custom_call.1} parent=27 // pred_check_branch
          %205 = sbr.rel (%p203) target = $region36
        $region35: #{tpu_custom_call.1} parent=27 // pred_region
          %206 = dma.done %s199, 256
        $region36: #{tpu_custom_call.1} parent=27 // pred_fallthru
          _
        %s207 = sand.u32 %s48, 1
        %s208 = scalar_lea.sflag [#allocation3], %s207
        %s209 = sand.u32 %s48, 1
        %s210 = smul.addr %s209, 16
        %s211 = scalar_lea.vmem [#allocation2], %s210
        %p212 = pneg %p61
        %p213 = pneg %p58
        %s214 = sand.u32 %s80, 1
        %s215 = scalar_lea.sflag [#allocation6], %s214
        %s216 = sand.u32 %s80, 1
        %s217 = smul.addr %s216, 16
        %s218 = scalar_lea.vmem [#allocation5], %s217
        %p219 = pneg %p93
        %p220 = pneg %p90
        %p221 = pneg %p119
        %p222 = pneg %p116
        %s223 = sand.u32 %s106, 1
        %s224 = scalar_lea.sflag [#allocation4], %s223
        %s225 = sand.u32 %s106, 1
        %s226 = smul.addr %s225, 32
        %s227 = scalar_lea.vmem [#allocation7], %s226
        %s228 = sadd.s32 %s26, %s27
        %p229 = scmp.lt.s32.totalorder %s228, 0
        %s230 = scalar_select %p229, %s228, 0
        %s231 = sadd.s32 %s26, %s27
        %p232 = scmp.lt.s32.totalorder %s231, 0
        %s233 = scalar_select %p232, %s231, 0
        %p234 = scmp.eq.s32.totalorder %s27, 0
        // Predicated region
        $region37: #{tpu_custom_call.1} parent=27 // pred_check
          %p235 = pneg %p234
        $region38: #{tpu_custom_call.1} parent=27 // pred_check_branch
          %237 = sbr.rel (%p235) target = $region40
        $region39: #{tpu_custom_call.1} parent=27 // pred_region
          %238 = vst [vmem:[%s227] sm:$0xff] 0.0
          %239 = vst [vmem:[%s227 + $0x8] sm:$0xff] 0.0
          %240 = vst [vmem:[%s227 + $0x10] sm:$0xff] 0.0
          %241 = vst [vmem:[%s227 + $0x18] sm:$0xff] 0.0
        $region40: #{tpu_custom_call.1} parent=27 // pred_fallthru
          _
        %v242 = vld [vmem:[%s193] sm:$0xff]
        %v243 = vld [vmem:[%s193 + $0x8] sm:$0xff]
        %v244 = vld [vmem:[%s202] sm:$0xff]
        %v245 = vld [vmem:[%s202 + $0x8] sm:$0xff]
        %s246 = sadd.s32 %s26, %s27
        %s247 = sadd.s32 %s246, 1
        %s248 = smul.u32 %s247, 8
        %p249 = scmp.le.s32.totalorder %s248, 8
        // Predicated region
        $region41: #{tpu_custom_call.1} parent=27 // pred_check
          %p250 = pneg %p249
        $region42: #{tpu_custom_call.1} parent=27 // pred_check_branch
          %252 = sbr.rel (%p250) target = $region44
        $region43: #{tpu_custom_call.1} parent=27 // pred_region
          %v253 = vxor.u32 %v242, 2147483648
          %v254 = vxor.u32 %v243, 2147483648
          %v255 = vmul.f32 %v253, 1.442695
          %v256 = vpow.pop %v255
          %v257 = vmul.f32 %v254, 1.442695
          %v258 = vpow.pop %v257
          %v259 = vadd.f32 %v256, 1.0
          %v260 = vadd.f32 %v258, 1.0
          %v261 = vrcp.pop %v259
          %v262 = vmul.f32 1.0, %v261
          %v263 = vrcp.pop %v260
          %v264 = vmul.f32 1.0, %v263
          %v265 = vmul.f32 %v262, %v244
          %v266 = vmul.f32 %v264, %v245
          %v267 = vmul.f32 %v262, %v262
          %v268 = vmul.f32 %v264, %v264
          %v269 = vmul.f32 %v244, %v244
          %v270 = vmul.f32 %v245, %v245
          %v271 = vadd.f32 %v267, %v269
          %v272 = vadd.f32 %v268, %v270
          %v273 = vadd.f32 %v265, 0.0
          %v274 = vadd.f32 %v266, 0.0
          %v275 = vadd.f32 %v271, 0.0
          %v276 = vadd.f32 %v272, 0.0
          %v277 = vld [vmem:[%s227] sm:$0xff]
          %v278 = vld [vmem:[%s227 + $0x8] sm:$0xff]
          %v279 = vadd.f32 %v277, %v273
          %v280 = vadd.f32 %v278, %v274
          %281 = vst [vmem:[%s227] sm:$0xff] %v279
          %282 = vst [vmem:[%s227 + $0x8] sm:$0xff] %v280
          %s283 = scalar_lea.vmem %s227, 16 [#allocation7]
          %v284 = vld [vmem:[%s283] sm:$0xff]
          %v285 = vld [vmem:[%s283 + $0x8] sm:$0xff]
          %v286 = vadd.f32 %v284, %v275
          %v287 = vadd.f32 %v285, %v276
          %288 = vst [vmem:[%s283] sm:$0xff] %v286
          %289 = vst [vmem:[%s283 + $0x8] sm:$0xff] %v287
        $region44: #{tpu_custom_call.1} parent=27 // pred_fallthru
          _
        %p290 = scmp.gt.s32.totalorder %s248, 8
        // Predicated region
        $region45: #{tpu_custom_call.1} parent=27 // pred_check
          %p291 = pneg %p290
        $region46: #{tpu_custom_call.1} parent=27 // pred_check_branch
          %293 = sbr.rel (%p291) target = $region48
        $region47: #{tpu_custom_call.1} parent=27 // pred_region
          %s294 = smul.u32 %s246, 8
          %v295 = vlaneseq
          %v296 = vshrl.u32 %v295, 7
          %v297 = vstv %s294
          %v298 = vadd.s32 %v297, %v296
          %vm299 = vcmp.lt.s32.totalorder %v298, 8
          %v300 = vsel %vm299, 1, 0
          %vm301 = vcmp.eq.s32.totalorder %v300, 1
          %v302 = vsel %vm301, %v242, 0.0
          %v303 = vsel %vm301, %v243, 0.0
          %v304 = vxor.u32 %v302, 2147483648
          %v305 = vxor.u32 %v303, 2147483648
          %v306 = vmul.f32 %v304, 1.442695
          %v307 = vpow.pop %v306
          %v308 = vmul.f32 %v305, 1.442695
          %v309 = vpow.pop %v308
          %v310 = vadd.f32 %v307, 1.0
          %v311 = vadd.f32 %v309, 1.0
          %v312 = vrcp.pop %v310
          %v313 = vmul.f32 1.0, %v312
          %v314 = vrcp.pop %v311
          %v315 = vmul.f32 1.0, %v314
          %v316 = vsel %vm301, %v313, 0.0
          %v317 = vsel %vm301, %v315, 0.0
          %v318 = vsel %vm301, %v244, 0.0
          %v319 = vsel %vm301, %v245, 0.0
          %v320 = vmul.f32 %v316, %v318
          %v321 = vmul.f32 %v317, %v319
          %v322 = vmul.f32 %v316, %v316
          %v323 = vmul.f32 %v317, %v317
          %v324 = vmul.f32 %v318, %v318
          %v325 = vmul.f32 %v319, %v319
          %v326 = vadd.f32 %v322, %v324
          %v327 = vadd.f32 %v323, %v325
          %v328 = vadd.f32 %v320, 0.0
          %v329 = vadd.f32 %v321, 0.0
          %v330 = vadd.f32 %v326, 0.0
          %v331 = vadd.f32 %v327, 0.0
          %v332 = vld [vmem:[%s227] sm:$0xff]
          %v333 = vld [vmem:[%s227 + $0x8] sm:$0xff]
          %v334 = vadd.f32 %v332, %v328
          %v335 = vadd.f32 %v333, %v329
          %336 = vst [vmem:[%s227] sm:$0xff] %v334
          %337 = vst [vmem:[%s227 + $0x8] sm:$0xff] %v335
          %s338 = scalar_lea.vmem %s227, 16 [#allocation7]
          %v339 = vld [vmem:[%s338] sm:$0xff]
          %v340 = vld [vmem:[%s338 + $0x8] sm:$0xff]
          %v341 = vadd.f32 %v339, %v330
          %v342 = vadd.f32 %v340, %v331
          %343 = vst [vmem:[%s338] sm:$0xff] %v341
          %344 = vst [vmem:[%s338 + $0x8] sm:$0xff] %v342
        $region48: #{tpu_custom_call.1} parent=27 // pred_fallthru
          _
        %s345 = sand.u32 %s106, 1
        %s346 = scalar_lea.sflag [#allocation4], %s345
        %s347 = sand.u32 %s106, 1
        %s348 = smul.addr %s347, 32
        %s349 = scalar_lea.vmem [#allocation7], %s348
        // Predicated region
        $region49: #{tpu_custom_call.1} parent=27 // pred_check
          %p350 = pneg %p116
        $region50: #{tpu_custom_call.1} parent=27 // pred_check_branch
          %352 = sbr.rel (%p350) target = $region52
        $region51: #{tpu_custom_call.1} parent=27 // pred_region
          %s354 = ssub.s32 512, 512
          %355 = vsyncadd %s346, %s354
          %s356 = smul.addr %s26, 4
          %s357 = smul.addr %s356, 128
          %s358 = scalar_lea.hbm %s2, %s357
          %s359 = sshll.u32 %s349, 4
          %s360 = int_to_ptr.vmem [resolvable:$true] %s359
          %365 = dma.vmem_to_hbm [thread:$0]  %s360, 512, %s358, %s346, 256, 256, 16
        $region52: #{tpu_custom_call.1} parent=27 // pred_fallthru
          _
      $region28: #{tpu_custom_call.1} parent=5 // pred_fallthru
        _
      %p366 = scmp.le.s32.totalorder 2, %s17
      // Predicated region
      $region53: #{tpu_custom_call.1} parent=5 // pred_check
        %p367 = pneg %p366
      $region54: #{tpu_custom_call.1} parent=5 // pred_check_branch
        %369 = sbr.rel (%p367) target = $region56
      $region55: #{tpu_custom_call.1} parent=5 // pred_region
        %s370 = ssub.s32 %s17, 2
        // Predicated region
        $region57: #{tpu_custom_call.1} parent=55 // pred_check
          %p371 = pneg %p122
        $region58: #{tpu_custom_call.1} parent=55 // pred_check_branch
          %373 = sbr.rel (%p371) target = $region60
        $region59: #{tpu_custom_call.1} parent=55 // pred_region
          %s374 = sand.u32 %s107, 1
          %s375 = scalar_lea.sflag [#allocation4], %s374
          %s376 = sand.u32 %s107, 1
          %s377 = smul.addr %s376, 32
          %s378 = scalar_lea.vmem [#allocation7], %s377
          %379 = dma.done %s375, 512
        $region60: #{tpu_custom_call.1} parent=55 // pred_fallthru
          _
      $region56: #{tpu_custom_call.1} parent=5 // pred_fallthru
        _
    $region6: #{tpu_custom_call.1} parent=1 // loop_footer
      %s21 = sadd.s32 1, %s17
    $region7: #{tpu_custom_call.1} parent=1 // loop_footer_branch
      %16 = sbr.rel target = $region3
    $region8: #{tpu_custom_call.1} parent=1 // loop_exit
      _
    %380 = vsyncpa [#allocation3], 1
    %s381 = scalar_lea.sflag [#allocation3], 1
    %382 = vsyncpa %s381, 1
    %383 = vsyncpa [#allocation6], 1
    %s384 = scalar_lea.sflag [#allocation6], 1
    %385 = vsyncpa %s384, 1
    %386 = vsyncpa [#allocation4], 1
    %s387 = scalar_lea.sflag [#allocation4], 1
    %388 = vsyncpa %s387, 1

</llo_original>
